<compile_context>
chip_gen: v7x
topology: tpu7x:2x2x1
jax: 0.10.0
libtpu: 0.0.40
codegen_flags: <defaults>
</compile_context>

<pallas_src>
import math

import jax
import jax.numpy as jnp
from jax.experimental import pallas as pl
from jax.experimental.pallas import tpu as pltpu

TP_TARGET = 2048  # pixel tile (lanes per grid step); rounded to 128 below


def _gelu_exact(x):
    # PyTorch nn.GELU() default is the exact erf-based GELU.
    return 0.5 * x * (1.0 + jax.lax.erf(x / jnp.sqrt(2.0).astype(x.dtype)))


def _round_up(n, m):
    return ((n + m - 1) // m) * m


def _pick_tile(n):
    # Largest 128-aligned tile <= TP_TARGET that does not over-pad small inputs.
    return min(TP_TARGET, _round_up(max(n, 1), 128))


def _const_spec(shape):
    # Whole-array block, constant index -> stays resident across grid steps.
    return pl.BlockSpec(shape, lambda *idx: (0,) * len(shape))


# ------------------- kernel 1: coordinate embedding path ---------------------
def _embed_kernel(coord_ref, w1_ref, b1_ref, w2_ref, b2_ref, wh_ref, bh_ref,
                  heads_ref):
    n_experts = heads_ref.shape[0] - 2
    x = coord_ref[...]                                               # (2, TP)
    h1 = jnp.dot(w1_ref[...], x, preferred_element_type=jnp.float32) + b1_ref[...]
    h1 = _gelu_exact(h1)                                             # (64, TP)
    h2 = jnp.dot(w2_ref[...], h1, preferred_element_type=jnp.float32) + b2_ref[...]
    h2 = _gelu_exact(h2)                                             # (64, TP)
    heads = (jnp.dot(wh_ref[...], h2, preferred_element_type=jnp.float32)
             + bh_ref[...])                                          # (E+2, TP)
    row = jax.lax.broadcasted_iota(jnp.int32, heads.shape, 0)
    # sigmoid on the routing rows, identity on the two offset rows
    heads_ref[...] = jnp.where(row < n_experts, jax.nn.sigmoid(heads), heads)


def _run_embed(coord, w1, b1, w2, b2, wh, bh, *, tp):
    nheads, hw_pad = wh.shape[0], coord.shape[1]
    return pl.pallas_call(
        _embed_kernel,
        out_shape=jax.ShapeDtypeStruct((nheads, hw_pad), jnp.float32),
        grid_spec=pltpu.PrefetchScalarGridSpec(
            num_scalar_prefetch=0,
            grid=(hw_pad // tp,),
            in_specs=[pl.BlockSpec((2, tp), lambda i: (0, i)),
                      _const_spec(w1.shape), _const_spec(b1.shape),
                      _const_spec(w2.shape), _const_spec(b2.shape),
                      _const_spec(wh.shape), _const_spec(bh.shape)],
            out_specs=pl.BlockSpec((nheads, tp), lambda i: (0, i))),
        compiler_params=pltpu.CompilerParams(dimension_semantics=("parallel",)),
    )(coord, w1, b1, w2, b2, wh, bh)


# ----------- kernel 2: stacked-expert compress/expand + residual -------------
def _moe_kernel(fea_ref, heads_ref, sel_ref, wc_ref, we_ref, amat_ref, out_ref):
    fea = fea_ref[0]                               # (C, TP) interpolated fea0
    # routing row e repeated across the R sublanes of expert e, offset rows
    # dropped — built on the MXU from the shared heads tile (no HBM repeat).
    rrep = jnp.dot(sel_ref[...], heads_ref[...],
                   preferred_element_type=jnp.float32)               # (E*R, TP)
    # compress for all experts in one MXU push: (E*R, C) @ (C, TP)
    compressed = jnp.dot(wc_ref[...], fea, preferred_element_type=jnp.float32)
    weighted = compressed * rrep                   # chunks r_e * (Wc_e @ fea)
    # amat = ones_E (x) I_R : sum chunks over experts, then rescale by routing
    scaled = jnp.dot(amat_ref[...], weighted,
                     preferred_element_type=jnp.float32) * rrep
    # expand for all experts in one MXU push: (C, E*R) @ (E*R, TP)
    out = jnp.dot(we_ref[...], scaled, preferred_element_type=jnp.float32)
    out_ref[0] = out + fea                         # residual with fea0


def _run_moe(fea0, heads, sel, wc_stack, we_stack, amat, *, tp):
    b, c, hw_pad = fea0.shape
    nheads = heads.shape[0]
    return pl.pallas_call(
        _moe_kernel,
        out_shape=jax.ShapeDtypeStruct((b, c, hw_pad), jnp.float32),
        grid_spec=pltpu.PrefetchScalarGridSpec(
            num_scalar_prefetch=0,
            # batch innermost: the heads tile index repeats across the batch
            # loop, so Pallas keeps it resident in VMEM (no re-DMA per image).
            grid=(hw_pad // tp, b),
            in_specs=[pl.BlockSpec((1, c, tp), lambda ti, bi: (bi, 0, ti)),
                      pl.BlockSpec((nheads, tp), lambda ti, bi: (0, ti)),
                      _const_spec(sel.shape),
                      _const_spec(wc_stack.shape),
                      _const_spec(we_stack.shape),
                      _const_spec(amat.shape)],
            out_specs=pl.BlockSpec((1, c, tp), lambda ti, bi: (bi, 0, ti))),
        compiler_params=pltpu.CompilerParams(
            dimension_semantics=("parallel", "parallel")),
    )(fea0, heads, sel, wc_stack, we_stack, amat)


# ------------------------------- parameters ---------------------------------
def init_params(key, channels, n_experts=4, reduction=16):
    reduced = max(channels // reduction, 1)
    ks = jax.random.split(key, 10)

    def u(k, shape, fan_in):
        bound = 1.0 / math.sqrt(fan_in)
        return jax.random.uniform(k, shape, jnp.float32, -bound, bound)

    return dict(
        # expert weights with the 1x1 kernel dims dropped: (E, R, C) / (E, C, R)
        weight_compress=u(ks[0], (n_experts, reduced, channels), channels),
        weight_expand=u(ks[1], (n_experts, channels, reduced), reduced),
        # body / heads stored PyTorch-style (out, in) for feature-major matmul
        w1=u(ks[2], (64, 4), 4), b1=u(ks[3], (64,), 4),
        w2=u(ks[4], (64, 64), 64), b2=u(ks[5], (64,), 64),
        wr=u(ks[6], (n_experts, 64), 64), br=u(ks[7], (n_experts,), 64),
        wo=u(ks[8], (2, 64), 64), bo=u(ks[9], (2,), 64),
    )


# --------------------------------- forward ----------------------------------
def scale_aware_upsampler(x, params, out_h, out_w, eps=1e-6):
    """x: (B, C, H, W) float32 (NCHW, like PyTorch). Returns (B, C, out_h, out_w)."""
    b, c, h, w = x.shape
    scale_h, scale_w = out_h / h, out_w / w
    hw = out_h * out_w
    n_experts = params["wr"].shape[0]
    reduced = params["weight_compress"].shape[1]

    tp = _pick_tile(hw)
    hw_pad = _round_up(hw, tp)
    pad = hw_pad - hw

    # --- coordinate features (constant channels folded into the bias) -------
    ih = jnp.arange(out_h, dtype=jnp.float32)
    iw = jnp.arange(out_w, dtype=jnp.float32)
    coor_h = (ih + 0.5) / scale_h - jnp.floor((ih + 0.5) / scale_h + eps) - 0.5
    coor_w = (iw + 0.5) / scale_w - jnp.floor((iw + 0.5) / scale_w + eps) - 0.5
    coord = jnp.stack(
        [jnp.broadcast_to(coor_h[:, None], (out_h, out_w)).reshape(hw),
         jnp.broadcast_to(coor_w[None, :], (out_h, out_w)).reshape(hw)], axis=0)
    coord = jnp.pad(coord, ((0, 0), (0, pad)))                     # (2, HWp)

    w1 = params["w1"]                                              # (64, 4)
    # fold the constant input channels (1/scale_w, 1/scale_h) into the bias
    b1_eff = (params["b1"] + w1[:, 0] * (1.0 / scale_w)
              + w1[:, 1] * (1.0 / scale_h))[:, None]               # (64, 1)
    w1_eff = w1[:, 2:4]                                            # (64, 2)
    w2, b2 = params["w2"], params["b2"][:, None]
    wh = jnp.concatenate([params["wr"], params["wo"]], axis=0)     # (E+2, 64)
    bh = jnp.concatenate([params["br"], params["bo"]], axis=0)[:, None]

    heads = _run_embed(coord, w1_eff, b1_eff, w2, b2, wh, bh, tp=tp)  # (E+2,HWp)
    offset = heads[n_experts:n_experts + 2, :hw].reshape(2, out_h, out_w)

    # --- grid_sample (zeros padding, align_corners=False) --------------------
    # NOTE: like the reference module, this requires h > 1 and w > 1.
    # TODO(synk): the data-dependent corner gather stays in plain JAX; an
    # in-kernel version needs a manual DMA gather (not expressible with
    # BlockSpec index_maps).  Bilinear weighting is fused into the gather here
    # so the MoE kernel only reads the (B, C, HW) interpolated slab.
    gx = (((iw[None, :] + 0.5) / scale_w - 0.5) * 2.0 / (w - 1) - 1.0
          + offset[0] * 2.0 / (w - 1))
    gy = (((ih[:, None] + 0.5) / scale_h - 0.5) * 2.0 / (h - 1) - 1.0
          + offset[1] * 2.0 / (h - 1))
    ix = ((gx + 1.0) * w - 1.0) / 2.0
    iy = ((gy + 1.0) * h - 1.0) / 2.0
    x0 = jnp.floor(ix)
    y0 = jnp.floor(iy)
    wx = ix - x0
    wy = iy - y0

    lin_idx, lin_wgt = [], []
    for dy in (0, 1):
        for dx in (0, 1):
            xi = x0 + dx
            yi = y0 + dy
            valid = ((xi >= 0) & (xi <= w - 1) & (yi >= 0) & (yi <= h - 1)
                     ).astype(jnp.float32)
            lin_idx.append((jnp.clip(yi, 0, h - 1).astype(jnp.int32) * w
                            + jnp.clip(xi, 0, w - 1).astype(jnp.int32)
                            ).reshape(hw))
            lin_wgt.append(((wx if dx else 1.0 - wx) * (wy if dy else 1.0 - wy)
                            * valid).reshape(hw))
    idx4 = jnp.stack(lin_idx, axis=0)                               # (4, HW)
    wgt4 = jnp.stack(lin_wgt, axis=0)                               # (4, HW)
    x_flat = x.reshape(b, c, h * w)
    gathered = jnp.take(x_flat, idx4, axis=2)                       # (B,C,4,HW)
    fea0 = (gathered * wgt4[None, None, :, :]).sum(axis=2)          # (B, C, HW)
    fea0 = jnp.pad(fea0, ((0, 0), (0, 0), (0, pad)))                # (B, C, HWp)

    # stacked expert weights: compress (E*R, C), expand (C, E*R)
    wc_stack = params["weight_compress"].reshape(n_experts * reduced, c)
    we_stack = jnp.transpose(params["weight_expand"], (1, 0, 2)).reshape(
        c, n_experts * reduced)
    # ones_E (x) I_R: sums the per-expert compressed chunks inside the kernel
    amat = jnp.tile(jnp.eye(reduced, dtype=jnp.float32), (n_experts, n_experts))
    # sel @ heads repeats routing row e across the R sublanes of expert e and
    # drops the two offset rows (tiny constant built at trace time).
    sel = jnp.repeat(jnp.eye(n_experts, n_experts + 2, dtype=jnp.float32),
                     reduced, axis=0)                               # (E*R, E+2)

    out = _run_moe(fea0, heads, sel, wc_stack, we_stack, amat, tp=tp)  # (B,C,HWp)
    return out[:, :, :hw].reshape(b, c, out_h, out_w)


if __name__ == "__main__":
    key = jax.random.PRNGKey(0)
    k_param, k_x = jax.random.split(key)

    channels, n_experts, reduction = 8, 4, 4
    b, h, w = 2, 8, 8
    out_h, out_w = 16, 16

    params = init_params(k_param, channels, n_experts, reduction)
    x = jax.random.normal(k_x, (b, channels, h, w), jnp.float32)

    out = scale_aware_upsampler(x, params, out_h, out_w)
    out = jax.block_until_ready(out)
    assert out.shape == (b, channels, out_h, out_w), out.shape
    assert bool(jnp.all(jnp.isfinite(out)))
    print("KERNEL_OK")
</pallas_src>

<mosaic_0001>
module attributes {stable_mosaic.version = 11 : i64} {
  func.func @_embed_kernel(%arg0: i32, %arg1: memref<2x256xf32, #tpu.memory_space<vmem>>, %arg2: memref<64x2xf32, #tpu.memory_space<vmem>>, %arg3: memref<64x1xf32, #tpu.memory_space<vmem>>, %arg4: memref<64x64xf32, #tpu.memory_space<vmem>>, %arg5: memref<64x1xf32, #tpu.memory_space<vmem>>, %arg6: memref<6x64xf32, #tpu.memory_space<vmem>>, %arg7: memref<6x1xf32, #tpu.memory_space<vmem>>, %arg8: memref<6x256xf32, #tpu.memory_space<vmem>>) attributes {dimension_semantics = [#tpu.dimension_semantics<parallel>], iteration_bounds = array<i64: 1>, scalar_prefetch = 0 : i64, scratch_operands = 0 : i64, tpu.core_type = #tpu.core_type<tc>, window_params = [{transform_indices = @transform_0, window_bounds = array<i64: 2, 256>}, {pipeline_mode = #tpu.pipeline_mode<synchronous>, transform_indices = @transform_1, window_bounds = array<i64: 64, 2>}, {pipeline_mode = #tpu.pipeline_mode<synchronous>, transform_indices = @transform_2, window_bounds = array<i64: 64, 1>}, {pipeline_mode = #tpu.pipeline_mode<synchronous>, transform_indices = @transform_3, window_bounds = array<i64: 64, 64>}, {pipeline_mode = #tpu.pipeline_mode<synchronous>, transform_indices = @transform_4, window_bounds = array<i64: 64, 1>}, {pipeline_mode = #tpu.pipeline_mode<synchronous>, transform_indices = @transform_5, window_bounds = array<i64: 6, 64>}, {pipeline_mode = #tpu.pipeline_mode<synchronous>, transform_indices = @transform_6, window_bounds = array<i64: 6, 1>}, {transform_indices = @transform_7, window_bounds = array<i64: 6, 256>}]} {
    %c0 = arith.constant 0 : index
    %c0_0 = arith.constant 0 : index
    %0 = vector.load %arg1[%c0, %c0_0] : memref<2x256xf32, #tpu.memory_space<vmem>>, vector<2x256xf32>
    %c0_1 = arith.constant 0 : index
    %c0_2 = arith.constant 0 : index
    %1 = vector.load %arg2[%c0_1, %c0_2] : memref<64x2xf32, #tpu.memory_space<vmem>>, vector<64x2xf32>
    %cst = arith.constant dense<0.000000e+00> : vector<64x256xf32>
    %2 = tpu.matmul %1, %0, %cst {dimension_numbers = #tpu.dot_dimension_numbers<[1], [0], [0], [1], [0, 0, 1, 1], [], []>} : vector<64x2xf32>, vector<2x256xf32>, vector<64x256xf32> -> vector<64x256xf32>
    %c0_3 = arith.constant 0 : index
    %c0_4 = arith.constant 0 : index
    %3 = vector.load %arg3[%c0_3, %c0_4] : memref<64x1xf32, #tpu.memory_space<vmem>>, vector<64x1xf32>
    %4 = vector.broadcast %3 : vector<64x1xf32> to vector<64x256xf32>
    %5 = arith.addf %2, %4 : vector<64x256xf32>
    %cst_5 = arith.constant 5.000000e-01 : f32
    %6 = vector.broadcast %cst_5 : f32 to vector<64x256xf32>
    %7 = arith.mulf %6, %5 : vector<64x256xf32>
    %cst_6 = arith.constant 2.000000e+00 : f32
    %8 = math.sqrt %cst_6 : f32
    %9 = vector.broadcast %8 : f32 to vector<64x256xf32>
    %10 = arith.divf %5, %9 : vector<64x256xf32>
    %11 = math.erf %10 : vector<64x256xf32>
    %cst_7 = arith.constant 1.000000e+00 : f32
    %12 = vector.broadcast %cst_7 : f32 to vector<64x256xf32>
    %13 = arith.addf %12, %11 : vector<64x256xf32>
    %14 = arith.mulf %7, %13 : vector<64x256xf32>
    %c0_8 = arith.constant 0 : index
    %c0_9 = arith.constant 0 : index
    %15 = vector.load %arg4[%c0_8, %c0_9] : memref<64x64xf32, #tpu.memory_space<vmem>>, vector<64x64xf32>
    %cst_10 = arith.constant dense<0.000000e+00> : vector<64x256xf32>
    %16 = tpu.matmul %15, %14, %cst_10 {dimension_numbers = #tpu.dot_dimension_numbers<[1], [0], [0], [1], [0, 0, 1, 1], [], []>} : vector<64x64xf32>, vector<64x256xf32>, vector<64x256xf32> -> vector<64x256xf32>
    %c0_11 = arith.constant 0 : index
    %c0_12 = arith.constant 0 : index
    %17 = vector.load %arg5[%c0_11, %c0_12] : memref<64x1xf32, #tpu.memory_space<vmem>>, vector<64x1xf32>
    %18 = vector.broadcast %17 : vector<64x1xf32> to vector<64x256xf32>
    %19 = arith.addf %16, %18 : vector<64x256xf32>
    %cst_13 = arith.constant 5.000000e-01 : f32
    %20 = vector.broadcast %cst_13 : f32 to vector<64x256xf32>
    %21 = arith.mulf %20, %19 : vector<64x256xf32>
    %cst_14 = arith.constant 2.000000e+00 : f32
    %22 = math.sqrt %cst_14 : f32
    %23 = vector.broadcast %22 : f32 to vector<64x256xf32>
    %24 = arith.divf %19, %23 : vector<64x256xf32>
    %25 = math.erf %24 : vector<64x256xf32>
    %cst_15 = arith.constant 1.000000e+00 : f32
    %26 = vector.broadcast %cst_15 : f32 to vector<64x256xf32>
    %27 = arith.addf %26, %25 : vector<64x256xf32>
    %28 = arith.mulf %21, %27 : vector<64x256xf32>
    %c0_16 = arith.constant 0 : index
    %c0_17 = arith.constant 0 : index
    %29 = vector.load %arg6[%c0_16, %c0_17] : memref<6x64xf32, #tpu.memory_space<vmem>>, vector<6x64xf32>
    %cst_18 = arith.constant dense<0.000000e+00> : vector<6x256xf32>
    %30 = tpu.matmul %29, %28, %cst_18 {dimension_numbers = #tpu.dot_dimension_numbers<[1], [0], [0], [1], [0, 0, 1, 1], [], []>} : vector<6x64xf32>, vector<64x256xf32>, vector<6x256xf32> -> vector<6x256xf32>
    %c0_19 = arith.constant 0 : index
    %c0_20 = arith.constant 0 : index
    %31 = vector.load %arg7[%c0_19, %c0_20] : memref<6x1xf32, #tpu.memory_space<vmem>>, vector<6x1xf32>
    %32 = vector.broadcast %31 : vector<6x1xf32> to vector<6x256xf32>
    %33 = arith.addf %30, %32 : vector<6x256xf32>
    %34 = tpu.iota {dimensions = array<i32: 0>} : vector<6x256xi32>
    %c4_i32 = arith.constant 4 : i32
    %35 = vector.broadcast %c4_i32 : i32 to vector<6x256xi32>
    %36 = arith.cmpi slt, %34, %35 : vector<6x256xi32>
    %37 = arith.negf %33 : vector<6x256xf32>
    %38 = math.exp %37 : vector<6x256xf32>
    %cst_21 = arith.constant 1.000000e+00 : f32
    %39 = vector.broadcast %cst_21 : f32 to vector<6x256xf32>
    %40 = arith.addf %39, %38 : vector<6x256xf32>
    %41 = arith.divf %39, %40 : vector<6x256xf32>
    %42 = arith.select %36, %41, %33 : vector<6x256xi1>, vector<6x256xf32>
    %c0_22 = arith.constant 0 : index
    %c0_23 = arith.constant 0 : index
    %43 = vector.load %arg8[%c0_22, %c0_23] : memref<6x256xf32, #tpu.memory_space<vmem>>, vector<6x256xf32>
    tpu.vector_store %arg8[%c0_22, %c0_23], %42 {strides = array<i32>} : memref<6x256xf32, #tpu.memory_space<vmem>>, vector<6x256xf32>,
    return
  }
  func.func @transform_0(%arg0: i32) -> (i32, i32) {
    %c0_i32 = arith.constant 0 : i32
    %c0_i32_0 = arith.constant 0 : i32
    return %c0_i32, %arg0 : i32, i32
  }
  func.func @transform_1(%arg0: i32) -> (i32, i32) {
    %c0_i32 = arith.constant 0 : i32
    %c0_i32_0 = arith.constant 0 : i32
    %c0_i32_1 = arith.constant 0 : i32
    return %c0_i32, %c0_i32_0 : i32, i32
  }
  func.func @transform_2(%arg0: i32) -> (i32, i32) {
    %c0_i32 = arith.constant 0 : i32
    %c0_i32_0 = arith.constant 0 : i32
    %c0_i32_1 = arith.constant 0 : i32
    return %c0_i32, %c0_i32_0 : i32, i32
  }
  func.func @transform_3(%arg0: i32) -> (i32, i32) {
    %c0_i32 = arith.constant 0 : i32
    %c0_i32_0 = arith.constant 0 : i32
    %c0_i32_1 = arith.constant 0 : i32
    return %c0_i32, %c0_i32_0 : i32, i32
  }
  func.func @transform_4(%arg0: i32) -> (i32, i32) {
    %c0_i32 = arith.constant 0 : i32
    %c0_i32_0 = arith.constant 0 : i32
    %c0_i32_1 = arith.constant 0 : i32
    return %c0_i32, %c0_i32_0 : i32, i32
  }
  func.func @transform_5(%arg0: i32) -> (i32, i32) {
    %c0_i32 = arith.constant 0 : i32
    %c0_i32_0 = arith.constant 0 : i32
    %c0_i32_1 = arith.constant 0 : i32
    return %c0_i32, %c0_i32_0 : i32, i32
  }
  func.func @transform_6(%arg0: i32) -> (i32, i32) {
    %c0_i32 = arith.constant 0 : i32
    %c0_i32_0 = arith.constant 0 : i32
    %c0_i32_1 = arith.constant 0 : i32
    return %c0_i32, %c0_i32_0 : i32, i32
  }
  func.func @transform_7(%arg0: i32) -> (i32, i32) {
    %c0_i32 = arith.constant 0 : i32
    %c0_i32_0 = arith.constant 0 : i32
    return %c0_i32, %arg0 : i32, i32
  }
}

</mosaic_0001>

<llo_original>
// kernel: tpu_custom_call.1
$region0: #{tpu_custom_call.1}
  #allocation0 [shape = 'u32[]', space=smem, size = 0x4, offset = 0x4, fixed_abs, tag = 'smem constant byte address 0x4 - core index']
  #allocation1 [shape = 'u32[144,128]{1,0:T(1,128)}', space=vmem, size = 0x12000, scoped, tag = 'internal scratch']
  %s0 = inlined_call_operand.vmem [shape: f32[2,256], index: 0, kind: input, shape index: {}]
  %s1 = inlined_call_operand.vmem [shape: f32[64,2], index: 1, kind: input, shape index: {}]
  %s2 = inlined_call_operand.vmem [shape: f32[64,1], index: 2, kind: input, shape index: {}]
  %s3 = inlined_call_operand.vmem [shape: f32[64,64], index: 3, kind: input, shape index: {}]
  %s4 = inlined_call_operand.vmem [shape: f32[64,1], index: 4, kind: input, shape index: {}]
  %s5 = inlined_call_operand.vmem [shape: f32[6,64], index: 5, kind: input, shape index: {}]
  %s6 = inlined_call_operand.vmem [shape: f32[6,1], index: 6, kind: input, shape index: {}]
  %s7 = inlined_call_operand.hbm [shape: f32[6,256], index: 7, kind: output, shape index: {}]
  %s8 = sld [smem:[#allocation0]]
  $region38: #{tpu_custom_call.1} parent=0
    _
  %s10 = ssub.s32 1, %s8
  %s11 = scalar_select 0, %s10, %s8
  $region1: #{tpu_custom_call.1} parent=0
    #allocation2 [shape = 'u8[8192]{0}', space=vmem, size = 0x2000, scoped, tag = 'output window, operand 0, single buffered']
    #allocation3 [shape = 's32[1]{0}', space=sflag, size = 0x4, scoped, tag = 'scoped memory for tpu_custom_call.1']
    %12 = vsyncpa [#allocation3], 0
    // Predicated region
    $region2: #{tpu_custom_call.1} parent=1 // pred_check
      _
    $region3: #{tpu_custom_call.1} parent=1 // pred_check_branch
      %14 = sbr.rel (0) target = $region5
    $region4: #{tpu_custom_call.1} parent=1 // pred_region
      _
    $region5: #{tpu_custom_call.1} parent=1 // pred_fallthru
      _
    // Predicated region
    $region6: #{tpu_custom_call.1} parent=1 // pred_check
      _
    $region7: #{tpu_custom_call.1} parent=1 // pred_check_branch
      %16 = sbr.rel (0) target = $region9
    $region8: #{tpu_custom_call.1} parent=1 // pred_region
      _
    $region9: #{tpu_custom_call.1} parent=1 // pred_fallthru
      _
    // Predicated region
    $region10: #{tpu_custom_call.1} parent=1 // pred_check
      _
    $region11: #{tpu_custom_call.1} parent=1 // pred_check_branch
      %18 = sbr.rel (0) target = $region13
    $region12: #{tpu_custom_call.1} parent=1 // pred_region
      _
    $region13: #{tpu_custom_call.1} parent=1 // pred_fallthru
      _
    // Predicated region
    $region14: #{tpu_custom_call.1} parent=1 // pred_check
      _
    $region15: #{tpu_custom_call.1} parent=1 // pred_check_branch
      %20 = sbr.rel (0) target = $region17
    $region16: #{tpu_custom_call.1} parent=1 // pred_region
      _
    $region17: #{tpu_custom_call.1} parent=1 // pred_fallthru
      _
    // Predicated region
    $region18: #{tpu_custom_call.1} parent=1 // pred_check
      _
    $region19: #{tpu_custom_call.1} parent=1 // pred_check_branch
      %22 = sbr.rel (0) target = $region21
    $region20: #{tpu_custom_call.1} parent=1 // pred_region
      _
    $region21: #{tpu_custom_call.1} parent=1 // pred_fallthru
      _
    // Predicated region
    $region22: #{tpu_custom_call.1} parent=1 // pred_check
      _
    $region23: #{tpu_custom_call.1} parent=1 // pred_check_branch
      %24 = sbr.rel (0) target = $region25
    $region24: #{tpu_custom_call.1} parent=1 // pred_region
      _
    $region25: #{tpu_custom_call.1} parent=1 // pred_fallthru
      _
    // Predicated region
    $region26: #{tpu_custom_call.1} parent=1 // pred_check
      _
    $region27: #{tpu_custom_call.1} parent=1 // pred_check_branch
      %26 = sbr.rel (0) target = $region29
    $region28: #{tpu_custom_call.1} parent=1 // pred_region
      _
    $region29: #{tpu_custom_call.1} parent=1 // pred_fallthru
      _
    %v27 = vld [vmem:[%s0] sm:$0xf]
    %v28 = vld [vmem:[%s1] sm:$0xff]
    %v29 = vld [vmem:[%s1 + $0x8] sm:$0xff]
    %v30 = vld [vmem:[%s1 + $0x10] sm:$0xff]
    %v31 = vld [vmem:[%s1 + $0x18] sm:$0xff]
    %v32 = vld [vmem:[%s1 + $0x20] sm:$0xff]
    %v33 = vld [vmem:[%s1 + $0x28] sm:$0xff]
    %v34 = vld [vmem:[%s1 + $0x30] sm:$0xff]
    %v35 = vld [vmem:[%s1 + $0x38] sm:$0xff]
    %v36 = vld [vmem:[%s2] sm:$0xff]
    %v37 = vld [vmem:[%s2 + $0x8] sm:$0xff]
    %v38 = vld [vmem:[%s2 + $0x10] sm:$0xff]
    %v39 = vld [vmem:[%s2 + $0x18] sm:$0xff]
    %v40 = vld [vmem:[%s2 + $0x20] sm:$0xff]
    %v41 = vld [vmem:[%s2 + $0x28] sm:$0xff]
    %v42 = vld [vmem:[%s2 + $0x30] sm:$0xff]
    %v43 = vld [vmem:[%s2 + $0x38] sm:$0xff]
    %45 = vset.pattern.permute.xlu0 0
    %46 = vperm.xlu0 %45, %v36
    %v47 = vpop.permute.xlu0 %46
    %50 = vset.pattern.permute.xlu0 0
    %51 = vperm.xlu0 %50, %v37
    %v52 = vpop.permute.xlu0 %51
    %55 = vset.pattern.permute.xlu0 0
    %56 = vperm.xlu0 %55, %v38
    %v57 = vpop.permute.xlu0 %56
    %60 = vset.pattern.permute.xlu0 0
    %61 = vperm.xlu0 %60, %v39
    %v62 = vpop.permute.xlu0 %61
    %65 = vset.pattern.permute.xlu0 0
    %66 = vperm.xlu0 %65, %v40
    %v67 = vpop.permute.xlu0 %66
    %70 = vset.pattern.permute.xlu0 0
    %71 = vperm.xlu0 %70, %v41
    %v72 = vpop.permute.xlu0 %71
    %75 = vset.pattern.permute.xlu0 0
    %76 = vperm.xlu0 %75, %v42
    %v77 = vpop.permute.xlu0 %76
    %80 = vset.pattern.permute.xlu0 0
    %81 = vperm.xlu0 %80, %v43
    %v82 = vpop.permute.xlu0 %81
    %v86 = vunpack.c.l.s4 1983009808
    %v87 = vunpack.c.0.s8 %v86
    %v88 = vlaneseq
    %v89 = vshrl.u32 %v88, 7
    %v90 = vsub.s32 %v87, %v89
    %v91 = vrot.slane %v27, %v90
    %v92 = vcombine.high %v91, %v91
    %vm93 = vcmask 15360
    %v95 = vsel %vm93, %v28, 0
    %v98 = vsel %vm93, %v29, 0
    %v101 = vsel %vm93, %v30, 0
    %v104 = vsel %vm93, %v31, 0
    %v107 = vsel %vm93, %v32, 0
    %v110 = vsel %vm93, %v33, 0
    %v113 = vsel %vm93, %v34, 0
    %v116 = vsel %vm93, %v35, 0
    %vm118 = vcmask 1041408
    %v119 = vsel %vm118, %v91, 0
    %v121 = vsel %vm118, %v92, 0
    %123 = vmatprep.subr.mxu0 %v121
    %124 = vmatpush1.msra.mxu0 %v119
    %125 = vmatprep.subr.mxu0 0.0
    %126 = vmatpush1.msra.mxu0 0.0
    %127 = vmatprep.subr.mxu0 0.0
    %128 = vmatpush1.msra.mxu0 0.0
    %129 = vmatprep.subr.mxu0 0.0
    %130 = vmatpush1.msra.mxu0 0.0
    %131 = vmatprep.subr.mxu0 0.0
    %132 = vmatpush1.msra.mxu0 0.0
    %133 = vmatprep.subr.mxu0 0.0
    %134 = vmatpush1.msra.mxu0 0.0
    %135 = vmatprep.subr.mxu0 0.0
    %136 = vmatpush1.msra.mxu0 0.0
    %137 = vmatprep.subr.mxu0 0.0
    %138 = vmatpush1.msra.mxu0 0.0
    %139 = vmatprep.subr.mxu0 0.0
    %140 = vmatpush1.msra.mxu0 0.0
    %141 = vmatprep.subr.mxu0 0.0
    %142 = vmatpush1.msra.mxu0 0.0
    %143 = vmatprep.subr.mxu0 0.0
    %144 = vmatpush1.msra.mxu0 0.0
    %145 = vmatprep.subr.mxu0 0.0
    %146 = vmatpush1.msra.mxu0 0.0
    %147 = vmatprep.subr.mxu0 0.0
    %148 = vmatpush1.msra.mxu0 0.0
    %149 = vmatprep.subr.mxu0 0.0
    %150 = vmatpush1.msra.mxu0 0.0
    %151 = vmatprep.subr.mxu0 0.0
    %152 = vmatpush1.msra.mxu0 0.0
    %153 = vmatprep.subr.mxu0 0.0
    %154 = vmatpush1.msra.mxu0 0.0
    %155 = vmatprep.subr.mxu0 0.0
    %156 = vmatpush1.msra.mxu0 0.0
    %157 = vmatprep.subr.mxu0 0.0
    %158 = vmatpush1.msra.mxu0 0.0
    %159 = vmatprep.subr.mxu0 0.0
    %160 = vmatpush1.msra.mxu0 0.0
    %161 = vmatprep.subr.mxu0 0.0
    %162 = vmatpush1.msra.mxu0 0.0
    %163 = vmatprep.subr.mxu0 0.0
    %164 = vmatpush1.msra.mxu0 0.0
    %165 = vmatprep.subr.mxu0 0.0
    %166 = vmatpush1.msra.mxu0 0.0
    %167 = vmatprep.subr.mxu0 0.0
    %168 = vmatpush1.msra.mxu0 0.0
    %169 = vmatprep.subr.mxu0 0.0
    %170 = vmatpush1.msra.mxu0 0.0
    %171 = vmatprep.subr.mxu0 0.0
    %172 = vmatpush1.msra.mxu0 0.0
    %173 = vmatprep.subr.mxu0 0.0
    %174 = vmatpush1.msra.mxu0 0.0
    %175 = vmatprep.subr.mxu0 0.0
    %176 = vmatpush1.msra.mxu0 0.0
    %177 = vmatprep.subr.mxu0 0.0
    %178 = vmatpush1.msra.mxu0 0.0
    %179 = vmatprep.subr.mxu0 0.0
    %180 = vmatpush1.msra.mxu0 0.0
    %181 = vmatprep.subr.mxu0 0.0
    %182 = vmatpush1.msra.mxu0 0.0
    %183 = vmatprep.subr.mxu0 0.0
    %184 = vmatpush1.msra.mxu0 0.0
    %185 = vmatprep.subr.mxu0 0.0
    %186 = vmatpush1.msra.mxu0 0.0
    %187 = vmatprep.mubr.f32.mxu0 0.0
    %188 = vmatmul.mubr.f32.gmra.mrb[0].mxu0 %v95
    %v189 = vpop.f32.mrb[0].mxu0
    %v190 = vadd.f32 %v47, %v189
    %v191 = vpop.f32.mrb[0].mxu0
    %v192 = vadd.f32 %v47, %v191
    %193 = vmatprep.mubr.f32.mxu0 0.0
    %194 = vmatmul.mubr.f32.gmra.mrb[0].mxu0 %v98
    %v195 = vpop.f32.mrb[0].mxu0
    %v196 = vadd.f32 %v52, %v195
    %v197 = vpop.f32.mrb[0].mxu0
    %v198 = vadd.f32 %v52, %v197
    %199 = vmatprep.mubr.f32.mxu0 0.0
    %200 = vmatmul.mubr.f32.gmra.mrb[0].mxu0 %v101
    %v201 = vpop.f32.mrb[0].mxu0
    %v202 = vadd.f32 %v57, %v201
    %v203 = vpop.f32.mrb[0].mxu0
    %v204 = vadd.f32 %v57, %v203
    %205 = vmatprep.mubr.f32.mxu0 0.0
    %206 = vmatmul.mubr.f32.gmra.mrb[0].mxu0 %v104
    %v207 = vpop.f32.mrb[0].mxu0
    %v208 = vadd.f32 %v62, %v207
    %v209 = vpop.f32.mrb[0].mxu0
    %v210 = vadd.f32 %v62, %v209
    %211 = vmatprep.mubr.f32.mxu0 0.0
    %212 = vmatmul.mubr.f32.gmra.mrb[0].mxu0 %v107
    %v213 = vpop.f32.mrb[0].mxu0
    %v214 = vadd.f32 %v67, %v213
    %v215 = vpop.f32.mrb[0].mxu0
    %v216 = vadd.f32 %v67, %v215
    %217 = vmatprep.mubr.f32.mxu0 0.0
    %218 = vmatmul.mubr.f32.gmra.mrb[0].mxu0 %v110
    %v219 = vpop.f32.mrb[0].mxu0
    %v220 = vadd.f32 %v72, %v219
    %v221 = vpop.f32.mrb[0].mxu0
    %v222 = vadd.f32 %v72, %v221
    %223 = vmatprep.mubr.f32.mxu0 0.0
    %224 = vmatmul.mubr.f32.gmra.mrb[0].mxu0 %v113
    %v225 = vpop.f32.mrb[0].mxu0
    %v226 = vadd.f32 %v77, %v225
    %v227 = vpop.f32.mrb[0].mxu0
    %v228 = vadd.f32 %v77, %v227
    %229 = vmatprep.mubr.f32.mxu0 0.0
    %230 = vmatmul.mubr.f32.gmra.mrb[0].mxu0 %v116
    %v231 = vpop.f32.mrb[0].mxu0
    %v232 = vadd.f32 %v82, %v231
    %v233 = vpop.f32.mrb[0].mxu0
    %v234 = vadd.f32 %v82, %v233
    %235 = vdwg.mxu0
    %v236 = vmul.f32 %v190, 0.5
    %v237 = vmul.f32 %v192, 0.5
    %v238 = vmul.f32 %v196, 0.5
    %v239 = vmul.f32 %v198, 0.5
    %v240 = vmul.f32 %v202, 0.5
    %v241 = vmul.f32 %v204, 0.5
    %v242 = vmul.f32 %v208, 0.5
    %v243 = vmul.f32 %v210, 0.5
    %v244 = vmul.f32 %v214, 0.5
    %v245 = vmul.f32 %v216, 0.5
    %v246 = vmul.f32 %v220, 0.5
    %v247 = vmul.f32 %v222, 0.5
    %v248 = vmul.f32 %v226, 0.5
    %v249 = vmul.f32 %v228, 0.5
    %v250 = vmul.f32 %v232, 0.5
    %v251 = vmul.f32 %v234, 0.5
    %v252 = vrcp.pop 1.4142135
    %v253 = vmul.f32 %v190, %v252
    %v254 = vmul.f32 %v192, %v252
    %v255 = vmul.f32 %v196, %v252
    %v256 = vmul.f32 %v198, %v252
    %v257 = vmul.f32 %v202, %v252
    %v258 = vmul.f32 %v204, %v252
    %v259 = vmul.f32 %v208, %v252
    %v260 = vmul.f32 %v210, %v252
    %v261 = vmul.f32 %v214, %v252
    %v262 = vmul.f32 %v216, %v252
    %v263 = vmul.f32 %v220, %v252
    %v264 = vmul.f32 %v222, %v252
    %v265 = vmul.f32 %v226, %v252
    %v266 = vmul.f32 %v228, %v252
    %v267 = vmul.f32 %v232, %v252
    %v268 = vmul.f32 %v234, %v252
    %v269 = verf.f32.pop %v253
    %v270 = verf.f32.pop %v254
    %v271 = verf.f32.pop %v255
    %v272 = verf.f32.pop %v256
    %v273 = verf.f32.pop %v257
    %v274 = verf.f32.pop %v258
    %v275 = verf.f32.pop %v259
    %v276 = verf.f32.pop %v260
    %v277 = verf.f32.pop %v261
    %v278 = verf.f32.pop %v262
    %v279 = verf.f32.pop %v263
    %v280 = verf.f32.pop %v264
    %v281 = verf.f32.pop %v265
    %v282 = verf.f32.pop %v266
    %v283 = verf.f32.pop %v267
    %v284 = verf.f32.pop %v268
    %v285 = vadd.f32 %v269, 1.0
    %v286 = vadd.f32 %v270, 1.0
    %v287 = vadd.f32 %v271, 1.0
    %v288 = vadd.f32 %v272, 1.0
    %v289 = vadd.f32 %v273, 1.0
    %v290 = vadd.f32 %v274, 1.0
    %v291 = vadd.f32 %v275, 1.0
    %v292 = vadd.f32 %v276, 1.0
    %v293 = vadd.f32 %v277, 1.0
    %v294 = vadd.f32 %v278, 1.0
    %v295 = vadd.f32 %v279, 1.0
    %v296 = vadd.f32 %v280, 1.0
    %v297 = vadd.f32 %v281, 1.0
    %v298 = vadd.f32 %v282, 1.0
    %v299 = vadd.f32 %v283, 1.0
    %v300 = vadd.f32 %v284, 1.0
    %v301 = vmul.f32 %v236, %v285
    %v302 = vmul.f32 %v237, %v286
    %v303 = vmul.f32 %v238, %v287
    %v304 = vmul.f32 %v239, %v288
    %v305 = vmul.f32 %v240, %v289
    %v306 = vmul.f32 %v241, %v290
    %v307 = vmul.f32 %v242, %v291
    %v308 = vmul.f32 %v243, %v292
    %v309 = vmul.f32 %v244, %v293
    %v310 = vmul.f32 %v245, %v294
    %v311 = vmul.f32 %v246, %v295
    %v312 = vmul.f32 %v247, %v296
    %v313 = vmul.f32 %v248, %v297
    %v314 = vmul.f32 %v249, %v298
    %v315 = vmul.f32 %v250, %v299
    %v316 = vmul.f32 %v251, %v300
    %v317 = vld [vmem:[%s3] sm:$0xff]
    %v318 = vld [vmem:[%s3 + $0x8] sm:$0xff]
    %v319 = vld [vmem:[%s3 + $0x10] sm:$0xff]
    %v320 = vld [vmem:[%s3 + $0x18] sm:$0xff]
    %v321 = vld [vmem:[%s3 + $0x20] sm:$0xff]
    %v322 = vld [vmem:[%s3 + $0x28] sm:$0xff]
    %v323 = vld [vmem:[%s3 + $0x30] sm:$0xff]
    %v324 = vld [vmem:[%s3 + $0x38] sm:$0xff]
    %v325 = vld [vmem:[%s4] sm:$0xff]
    %v326 = vld [vmem:[%s4 + $0x8] sm:$0xff]
    %v327 = vld [vmem:[%s4 + $0x10] sm:$0xff]
    %v328 = vld [vmem:[%s4 + $0x18] sm:$0xff]
    %v329 = vld [vmem:[%s4 + $0x20] sm:$0xff]
    %v330 = vld [vmem:[%s4 + $0x28] sm:$0xff]
    %v331 = vld [vmem:[%s4 + $0x30] sm:$0xff]
    %v332 = vld [vmem:[%s4 + $0x38] sm:$0xff]
    %334 = vset.pattern.permute.xlu0 0
    %335 = vperm.xlu0 %334, %v325
    %v336 = vpop.permute.xlu0 %335
    %339 = vset.pattern.permute.xlu0 0
    %340 = vperm.xlu0 %339, %v326
    %v341 = vpop.permute.xlu0 %340
    %344 = vset.pattern.permute.xlu0 0
    %345 = vperm.xlu0 %344, %v327
    %v346 = vpop.permute.xlu0 %345
    %349 = vset.pattern.permute.xlu0 0
    %350 = vperm.xlu0 %349, %v328
    %v351 = vpop.permute.xlu0 %350
    %354 = vset.pattern.permute.xlu0 0
    %355 = vperm.xlu0 %354, %v329
    %v356 = vpop.permute.xlu0 %355
    %359 = vset.pattern.permute.xlu0 0
    %360 = vperm.xlu0 %359, %v330
    %v361 = vpop.permute.xlu0 %360
    %364 = vset.pattern.permute.xlu0 0
    %365 = vperm.xlu0 %364, %v331
    %v366 = vpop.permute.xlu0 %365
    %369 = vset.pattern.permute.xlu0 0
    %370 = vperm.xlu0 %369, %v332
    %v371 = vpop.permute.xlu0 %370
    %vm373 = vcmask 523264
    %v375 = vsel %vm373, %v317, 0
    %v378 = vsel %vm373, %v318, 0
    %v381 = vsel %vm373, %v319, 0
    %v384 = vsel %vm373, %v320, 0
    %v387 = vsel %vm373, %v321, 0
    %v390 = vsel %vm373, %v322, 0
    %v393 = vsel %vm373, %v323, 0
    %v396 = vsel %vm373, %v324, 0
    %398 = vmatprep.subr.mxu0 %v302
    %399 = vmatpush1.msra.mxu0 %v301
    %400 = vmatprep.subr.mxu0 %v304
    %401 = vmatpush1.msra.mxu0 %v303
    %402 = vmatprep.subr.mxu0 %v306
    %403 = vmatpush1.msra.mxu0 %v305
    %404 = vmatprep.subr.mxu0 %v308
    %405 = vmatpush1.msra.mxu0 %v307
    %406 = vmatprep.subr.mxu0 %v310
    %407 = vmatpush1.msra.mxu0 %v309
    %408 = vmatprep.subr.mxu0 %v312
    %409 = vmatpush1.msra.mxu0 %v311
    %410 = vmatprep.subr.mxu0 %v314
    %411 = vmatpush1.msra.mxu0 %v313
    %412 = vmatprep.subr.mxu0 %v316
    %413 = vmatpush1.msra.mxu0 %v315
    %414 = vmatprep.subr.mxu0 0.0
    %415 = vmatpush1.msra.mxu0 0.0
    %416 = vmatprep.subr.mxu0 0.0
    %417 = vmatpush1.msra.mxu0 0.0
    %418 = vmatprep.subr.mxu0 0.0
    %419 = vmatpush1.msra.mxu0 0.0
    %420 = vmatprep.subr.mxu0 0.0
    %421 = vmatpush1.msra.mxu0 0.0
    %422 = vmatprep.subr.mxu0 0.0
    %423 = vmatpush1.msra.mxu0 0.0
    %424 = vmatprep.subr.mxu0 0.0
    %425 = vmatpush1.msra.mxu0 0.0
    %426 = vmatprep.subr.mxu0 0.0
    %427 = vmatpush1.msra.mxu0 0.0
    %428 = vmatprep.subr.mxu0 0.0
    %429 = vmatpush1.msra.mxu0 0.0
    %430 = vmatprep.subr.mxu0 0.0
    %431 = vmatpush1.msra.mxu0 0.0
    %432 = vmatprep.subr.mxu0 0.0
    %433 = vmatpush1.msra.mxu0 0.0
    %434 = vmatprep.subr.mxu0 0.0
    %435 = vmatpush1.msra.mxu0 0.0
    %436 = vmatprep.subr.mxu0 0.0
    %437 = vmatpush1.msra.mxu0 0.0
    %438 = vmatprep.subr.mxu0 0.0
    %439 = vmatpush1.msra.mxu0 0.0
    %440 = vmatprep.subr.mxu0 0.0
    %441 = vmatpush1.msra.mxu0 0.0
    %442 = vmatprep.subr.mxu0 0.0
    %443 = vmatpush1.msra.mxu0 0.0
    %444 = vmatprep.subr.mxu0 0.0
    %445 = vmatpush1.msra.mxu0 0.0
    %446 = vmatprep.subr.mxu0 0.0
    %447 = vmatpush1.msra.mxu0 0.0
    %448 = vmatprep.subr.mxu0 0.0
    %449 = vmatpush1.msra.mxu0 0.0
    %450 = vmatprep.subr.mxu0 0.0
    %451 = vmatpush1.msra.mxu0 0.0
    %452 = vmatprep.subr.mxu0 0.0
    %453 = vmatpush1.msra.mxu0 0.0
    %454 = vmatprep.subr.mxu0 0.0
    %455 = vmatpush1.msra.mxu0 0.0
    %456 = vmatprep.subr.mxu0 0.0
    %457 = vmatpush1.msra.mxu0 0.0
    %458 = vmatprep.subr.mxu0 0.0
    %459 = vmatpush1.msra.mxu0 0.0
    %460 = vmatprep.subr.mxu0 0.0
    %461 = vmatpush1.msra.mxu0 0.0
    %462 = vmatprep.mubr.f32.mxu0 0.0
    %463 = vmatmul.mubr.f32.gmra.mrb[0].mxu0 %v375
    %v464 = vpop.f32.mrb[0].mxu0
    %v465 = vadd.f32 %v336, %v464
    %v466 = vpop.f32.mrb[0].mxu0
    %v467 = vadd.f32 %v336, %v466
    %468 = vmatprep.mubr.f32.mxu0 0.0
    %469 = vmatmul.mubr.f32.gmra.mrb[0].mxu0 %v378
    %v470 = vpop.f32.mrb[0].mxu0
    %v471 = vadd.f32 %v341, %v470
    %v472 = vpop.f32.mrb[0].mxu0
    %v473 = vadd.f32 %v341, %v472
    %474 = vmatprep.mubr.f32.mxu0 0.0
    %475 = vmatmul.mubr.f32.gmra.mrb[0].mxu0 %v381
    %v476 = vpop.f32.mrb[0].mxu0
    %v477 = vadd.f32 %v346, %v476
    %v478 = vpop.f32.mrb[0].mxu0
    %v479 = vadd.f32 %v346, %v478
    %480 = vmatprep.mubr.f32.mxu0 0.0
    %481 = vmatmul.mubr.f32.gmra.mrb[0].mxu0 %v384
    %v482 = vpop.f32.mrb[0].mxu0
    %v483 = vadd.f32 %v351, %v482
    %v484 = vpop.f32.mrb[0].mxu0
    %v485 = vadd.f32 %v351, %v484
    %486 = vmatprep.mubr.f32.mxu0 0.0
    %487 = vmatmul.mubr.f32.gmra.mrb[0].mxu0 %v387
    %v488 = vpop.f32.mrb[0].mxu0
    %v489 = vadd.f32 %v356, %v488
    %v490 = vpop.f32.mrb[0].mxu0
    %v491 = vadd.f32 %v356, %v490
    %492 = vmatprep.mubr.f32.mxu0 0.0
    %493 = vmatmul.mubr.f32.gmra.mrb[0].mxu0 %v390
    %v494 = vpop.f32.mrb[0].mxu0
    %v495 = vadd.f32 %v361, %v494
    %v496 = vpop.f32.mrb[0].mxu0
    %v497 = vadd.f32 %v361, %v496
    %498 = vmatprep.mubr.f32.mxu0 0.0
    %499 = vmatmul.mubr.f32.gmra.mrb[0].mxu0 %v393
    %v500 = vpop.f32.mrb[0].mxu0
    %v501 = vadd.f32 %v366, %v500
    %v502 = vpop.f32.mrb[0].mxu0
    %v503 = vadd.f32 %v366, %v502
    %504 = vmatprep.mubr.f32.mxu0 0.0
    %505 = vmatmul.mubr.f32.gmra.mrb[0].mxu0 %v396
    %v506 = vpop.f32.mrb[0].mxu0
    %v507 = vadd.f32 %v371, %v506
    %v508 = vpop.f32.mrb[0].mxu0
    %v509 = vadd.f32 %v371, %v508
    %510 = vdwg.mxu0
    %v511 = vmul.f32 %v465, 0.5
    %v512 = vmul.f32 %v467, 0.5
    %v513 = vmul.f32 %v471, 0.5
    %v514 = vmul.f32 %v473, 0.5
    %v515 = vmul.f32 %v477, 0.5
    %v516 = vmul.f32 %v479, 0.5
    %v517 = vmul.f32 %v483, 0.5
    %v518 = vmul.f32 %v485, 0.5
    %v519 = vmul.f32 %v489, 0.5
    %v520 = vmul.f32 %v491, 0.5
    %v521 = vmul.f32 %v495, 0.5
    %v522 = vmul.f32 %v497, 0.5
    %v523 = vmul.f32 %v501, 0.5
    %v524 = vmul.f32 %v503, 0.5
    %v525 = vmul.f32 %v507, 0.5
    %v526 = vmul.f32 %v509, 0.5
    %v527 = vmul.f32 %v465, %v252
    %v528 = vmul.f32 %v467, %v252
    %v529 = vmul.f32 %v471, %v252
    %v530 = vmul.f32 %v473, %v252
    %v531 = vmul.f32 %v477, %v252
    %v532 = vmul.f32 %v479, %v252
    %v533 = vmul.f32 %v483, %v252
    %v534 = vmul.f32 %v485, %v252
    %v535 = vmul.f32 %v489, %v252
    %v536 = vmul.f32 %v491, %v252
    %v537 = vmul.f32 %v495, %v252
    %v538 = vmul.f32 %v497, %v252
    %v539 = vmul.f32 %v501, %v252
    %v540 = vmul.f32 %v503, %v252
    %v541 = vmul.f32 %v507, %v252
    %v542 = vmul.f32 %v509, %v252
    %v543 = verf.f32.pop %v527
    %v544 = verf.f32.pop %v528
    %v545 = verf.f32.pop %v529
    %v546 = verf.f32.pop %v530
    %v547 = verf.f32.pop %v531
    %v548 = verf.f32.pop %v532
    %v549 = verf.f32.pop %v533
    %v550 = verf.f32.pop %v534
    %v551 = verf.f32.pop %v535
    %v552 = verf.f32.pop %v536
    %v553 = verf.f32.pop %v537
    %v554 = verf.f32.pop %v538
    %v555 = verf.f32.pop %v539
    %v556 = verf.f32.pop %v540
    %v557 = verf.f32.pop %v541
    %v558 = verf.f32.pop %v542
    %v559 = vadd.f32 %v543, 1.0
    %v560 = vadd.f32 %v544, 1.0
    %v561 = vadd.f32 %v545, 1.0
    %v562 = vadd.f32 %v546, 1.0
    %v563 = vadd.f32 %v547, 1.0
    %v564 = vadd.f32 %v548, 1.0
    %v565 = vadd.f32 %v549, 1.0
    %v566 = vadd.f32 %v550, 1.0
    %v567 = vadd.f32 %v551, 1.0
    %v568 = vadd.f32 %v552, 1.0
    %v569 = vadd.f32 %v553, 1.0
    %v570 = vadd.f32 %v554, 1.0
    %v571 = vadd.f32 %v555, 1.0
    %v572 = vadd.f32 %v556, 1.0
    %v573 = vadd.f32 %v557, 1.0
    %v574 = vadd.f32 %v558, 1.0
    %v575 = vmul.f32 %v511, %v559
    %v576 = vmul.f32 %v512, %v560
    %v577 = vmul.f32 %v513, %v561
    %v578 = vmul.f32 %v514, %v562
    %v579 = vmul.f32 %v515, %v563
    %v580 = vmul.f32 %v516, %v564
    %v581 = vmul.f32 %v517, %v565
    %v582 = vmul.f32 %v518, %v566
    %v583 = vmul.f32 %v519, %v567
    %v584 = vmul.f32 %v520, %v568
    %v585 = vmul.f32 %v521, %v569
    %v586 = vmul.f32 %v522, %v570
    %v587 = vmul.f32 %v523, %v571
    %v588 = vmul.f32 %v524, %v572
    %v589 = vmul.f32 %v525, %v573
    %v590 = vmul.f32 %v526, %v574
    %v591 = vld [vmem:[%s5] sm:$0x3f]
    %v592 = vld [vmem:[%s6] sm:$0x3f]
    %594 = vset.pattern.permute.xlu0 0
    %595 = vperm.xlu0 %594, %v592
    %v596 = vpop.permute.xlu0 %595
    %v599 = vsel %vm373, %v591, 0
    %601 = vmatprep.subr.mxu0 %v576
    %602 = vmatpush1.msra.mxu0 %v575
    %603 = vmatprep.subr.mxu0 %v578
    %604 = vmatpush1.msra.mxu0 %v577
    %605 = vmatprep.subr.mxu0 %v580
    %606 = vmatpush1.msra.mxu0 %v579
    %607 = vmatprep.subr.mxu0 %v582
    %608 = vmatpush1.msra.mxu0 %v581
    %609 = vmatprep.subr.mxu0 %v584
    %610 = vmatpush1.msra.mxu0 %v583
    %611 = vmatprep.subr.mxu0 %v586
    %612 = vmatpush1.msra.mxu0 %v585
    %613 = vmatprep.subr.mxu0 %v588
    %614 = vmatpush1.msra.mxu0 %v587
    %615 = vmatprep.subr.mxu0 %v590
    %616 = vmatpush1.msra.mxu0 %v589
    %617 = vmatprep.subr.mxu0 0.0
    %618 = vmatpush1.msra.mxu0 0.0
    %619 = vmatprep.subr.mxu0 0.0
    %620 = vmatpush1.msra.mxu0 0.0
    %621 = vmatprep.subr.mxu0 0.0
    %622 = vmatpush1.msra.mxu0 0.0
    %623 = vmatprep.subr.mxu0 0.0
    %624 = vmatpush1.msra.mxu0 0.0
    %625 = vmatprep.subr.mxu0 0.0
    %626 = vmatpush1.msra.mxu0 0.0
    %627 = vmatprep.subr.mxu0 0.0
    %628 = vmatpush1.msra.mxu0 0.0
    %629 = vmatprep.subr.mxu0 0.0
    %630 = vmatpush1.msra.mxu0 0.0
    %631 = vmatprep.subr.mxu0 0.0
    %632 = vmatpush1.msra.mxu0 0.0
    %633 = vmatprep.subr.mxu0 0.0
    %634 = vmatpush1.msra.mxu0 0.0
    %635 = vmatprep.subr.mxu0 0.0
    %636 = vmatpush1.msra.mxu0 0.0
    %637 = vmatprep.subr.mxu0 0.0
    %638 = vmatpush1.msra.mxu0 0.0
    %639 = vmatprep.subr.mxu0 0.0
    %640 = vmatpush1.msra.mxu0 0.0
    %641 = vmatprep.subr.mxu0 0.0
    %642 = vmatpush1.msra.mxu0 0.0
    %643 = vmatprep.subr.mxu0 0.0
    %644 = vmatpush1.msra.mxu0 0.0
    %645 = vmatprep.subr.mxu0 0.0
    %646 = vmatpush1.msra.mxu0 0.0
    %647 = vmatprep.subr.mxu0 0.0
    %648 = vmatpush1.msra.mxu0 0.0
    %649 = vmatprep.subr.mxu0 0.0
    %650 = vmatpush1.msra.mxu0 0.0
    %651 = vmatprep.subr.mxu0 0.0
    %652 = vmatpush1.msra.mxu0 0.0
    %653 = vmatprep.subr.mxu0 0.0
    %654 = vmatpush1.msra.mxu0 0.0
    %655 = vmatprep.subr.mxu0 0.0
    %656 = vmatpush1.msra.mxu0 0.0
    %657 = vmatprep.subr.mxu0 0.0
    %658 = vmatpush1.msra.mxu0 0.0
    %659 = vmatprep.subr.mxu0 0.0
    %660 = vmatpush1.msra.mxu0 0.0
    %661 = vmatprep.subr.mxu0 0.0
    %662 = vmatpush1.msra.mxu0 0.0
    %663 = vmatprep.subr.mxu0 0.0
    %664 = vmatpush1.msra.mxu0 0.0
    %665 = vmatprep.mubr.f32.mxu0 0.0
    %666 = vmatmul.mubr.f32.gmra.mrb[0].mxu0 %v599
    %v667 = vpop.f32.mrb[0].mxu0
    %v668 = vadd.f32 %v596, %v667
    %v669 = vpop.f32.mrb[0].mxu0
    %v670 = vadd.f32 %v596, %v669
    %671 = vdwg.mxu0
    %v672 = vlaneseq
    %v673 = vshrl.u32 %v672, 7
    %vm674 = vcmp.lt.s32.totalorder %v673, 4
    %v675 = vxor.u32 %v668, 2147483648
    %v676 = vxor.u32 %v670, 2147483648
    %v677 = vmul.f32 %v675, 1.442695
    %v678 = vpow.pop %v677
    %v679 = vmul.f32 %v676, 1.442695
    %v680 = vpow.pop %v679
    %v681 = vadd.f32 %v678, 1.0
    %v682 = vadd.f32 %v680, 1.0
    %v683 = vrcp.pop %v681
    %v684 = vmul.f32 1.0, %v683
    %v685 = vrcp.pop %v682
    %v686 = vmul.f32 1.0, %v685
    %v687 = vsel %vm674, %v684, %v668
    %v688 = vsel %vm674, %v686, %v670
    %689 = vst [vmem:[#allocation2] sm:$0x3f] %v687
    %690 = vst [vmem:[#allocation2 + $0x8] sm:$0x3f] %v688
    // Predicated region
    $region30: #{tpu_custom_call.1} parent=1 // pred_check
      _
    $region31: #{tpu_custom_call.1} parent=1 // pred_check_branch
      %692 = sbr.rel (0) target = $region33
    $region32: #{tpu_custom_call.1} parent=1 // pred_region
      %s694 = ssub.s32 256, 256
      %695 = vsyncadd [#allocation3], %s694
      %s697 = sshll.u32 [#allocation2], 4
      %s698 = int_to_ptr.vmem [resolvable:$true] %s697
      %700 = dma.vmem_to_hbm [thread:$0]  %s698, 256, %s7, [#allocation3]
    $region33: #{tpu_custom_call.1} parent=1 // pred_fallthru
      _
    // Predicated region
    $region34: #{tpu_custom_call.1} parent=1 // pred_check
      _
    $region35: #{tpu_custom_call.1} parent=1 // pred_check_branch
      %702 = sbr.rel (0) target = $region37
    $region36: #{tpu_custom_call.1} parent=1 // pred_region
      %703 = dma.done [#allocation3], 256
    $region37: #{tpu_custom_call.1} parent=1 // pred_fallthru
      _
    %704 = vsyncpa [#allocation3], 1

</llo_original>
